<compile_context>
chip_gen: v7x
topology: tpu7x:2x2x1
jax: 0.10.0
libtpu: 0.0.40
codegen_flags: <defaults>
</compile_context>

<pallas_src>
import functools

import jax
import jax.numpy as jnp
from jax import lax
from jax.experimental import pallas as pl
from jax.experimental.pallas import tpu as pltpu


def _round_up(x, m):
    return ((x + m - 1) // m) * m


def _mean_aggre_kernel(dst_ref, x_ref, wt_ref, b_ref, invdeg_ref, o_ref,
                       acc_ref, *, tile_n, tile_e):
    """Grid: (N tiles [parallel], F blocks [parallel], edge tiles [arbitrary])."""
    k = pl.program_id(2)

    @pl.when(k == 0)
    def _():
        acc_ref[...] = jnp.zeros_like(acc_ref)

    # ---- Linear + ReLU on this tile of edges (bf16 MXU inputs, f32 acc) ----
    y = jnp.dot(x_ref[...], wt_ref[...],
                preferred_element_type=jnp.float32)               # (TE, TF) f32
    y = jnp.maximum(y + b_ref[...], 0.0)

    # ---- copy_edge + scatter-add via a pre-transposed one-hot matmul -------
    # dst ids for this edge tile: lane-dense (1, TE) row (dynamic sublane pick).
    dst = dst_ref[pl.ds(k, 1), :]                                  # (1, TE) int32
    n0 = pl.program_id(0) * tile_n
    row = lax.broadcasted_iota(jnp.int32, (tile_n, tile_e), 0) + n0  # (TN, TE)
    # Padded edges (dst == -1) and dst ids outside this N tile match no row.
    onehot_t = (row == dst).astype(jnp.bfloat16)                   # exact in bf16

    # MXU-native contraction over the edge dimension -> (TN, TF) f32 partial sum.
    acc_ref[...] += jnp.dot(onehot_t, y.astype(jnp.bfloat16),
                            preferred_element_type=jnp.float32)

    # ---- finalize: multiply by precomputed reciprocal in-degree ------------
    @pl.when(k == pl.num_programs(2) - 1)
    def _():
        o_ref[...] = (acc_ref[...] * invdeg_ref[...]).astype(o_ref.dtype)


def mean_aggre_forward(src_emb, edge_dst, n_dst, weight, bias, *,
                       tile_e=512, tile_f=128, tile_n=256):
    """src_emb: [E, F] per-edge source embeddings; edge_dst: [E] int dst ids.

    `edge_dst` / `n_dst` stand in for the DGL `block` (its edge -> dst-node map).
    """
    E, F = src_emb.shape
    out_dtype = src_emb.dtype

    # Lane-dense feature blocks; sublane-aligned / tiled destination dimension.
    F_pad = max(tile_f, _round_up(F, tile_f))
    if n_dst <= tile_n:
        tile_n = max(8, _round_up(n_dst, 8))      # single N tile for small graphs
    N_pad = _round_up(n_dst, tile_n)
    tile_e = min(tile_e, _round_up(E, 256))       # don't overshoot tiny edge counts
    E_pad = _round_up(E, tile_e)
    n_e_tiles = E_pad // tile_e

    # Pad + cast inputs in the wrapper (bf16 halves the streamed HBM bytes).
    # Padded edges get dst = -1 so the one-hot drops them; padded weight columns
    # and bias lanes are zero so padded output lanes stay 0.
    x = jnp.zeros((E_pad, F_pad), jnp.bfloat16).at[:E, :F].set(
        src_emb.astype(jnp.bfloat16))
    dst2d = (jnp.full((E_pad,), -1, jnp.int32)
             .at[:E].set(edge_dst.astype(jnp.int32))
             .reshape(n_e_tiles, tile_e))                          # lane-dense ids
    wt = jnp.zeros((F_pad, F_pad), jnp.bfloat16).at[:F, :F].set(
        weight.T.astype(jnp.bfloat16))            # torch Linear weight is [out, in]
    b2d = jnp.zeros((1, F_pad), jnp.float32).at[0, :F].set(bias.astype(jnp.float32))

    # Reciprocal in-degree precomputed in plain JAX (tiny segment-sum over ids);
    # isolated dst nodes keep 1/max(cnt,1) -> output stays exactly 0.
    cnt = jnp.zeros((N_pad,), jnp.float32).at[edge_dst.astype(jnp.int32)].add(1.0)
    inv_deg = (1.0 / jnp.maximum(cnt, 1.0)).reshape(N_pad, 1)

    kernel = functools.partial(_mean_aggre_kernel, tile_n=tile_n, tile_e=tile_e)

    out = pl.pallas_call(
        kernel,
        out_shape=jax.ShapeDtypeStruct((N_pad, F_pad), out_dtype),
        grid_spec=pltpu.PrefetchScalarGridSpec(
            num_scalar_prefetch=0,
            grid=(N_pad // tile_n, F_pad // tile_f, E_pad // tile_e),
            in_specs=[
                # dst ids: resident lane-dense table (one DMA total).
                pl.BlockSpec((n_e_tiles, tile_e), lambda n, f, k: (0, 0)),
                # edge features (bf16 stream, tiled over edges).
                pl.BlockSpec((tile_e, F_pad), lambda n, f, k: (k, 0)),
                # W^T column block (bf16).
                pl.BlockSpec((F_pad, tile_f), lambda n, f, k: (0, f)),
                # bias block (f32, added to f32 matmul output).
                pl.BlockSpec((1, tile_f), lambda n, f, k: (0, f)),
                # reciprocal in-degree for this N tile.
                pl.BlockSpec((tile_n, 1), lambda n, f, k: (n, 0)),
            ],
            out_specs=pl.BlockSpec((tile_n, tile_f), lambda n, f, k: (n, f)),
            scratch_shapes=[
                pltpu.VMEM((tile_n, tile_f), jnp.float32),  # running sum per dst tile
            ],
        ),
        compiler_params=pltpu.CompilerParams(
            dimension_semantics=("parallel", "parallel", "arbitrary")),
    )(dst2d, x, wt, b2d, inv_deg)

    return out[:n_dst, :F]


if __name__ == "__main__":
    F_DIM = 32      # feature_dim of the nn.Linear(feature_dim, feature_dim)
    E = 600         # number of edges in the block (not a multiple of tile_e)
    N_DST = 24      # number of destination nodes

    key = jax.random.PRNGKey(0)
    k_w, k_b, k_x, k_d = jax.random.split(key, 4)

    # Deterministic "Linear" parameters (torch layout: weight [out, in], bias [out]).
    weight = jax.random.normal(k_w, (F_DIM, F_DIM), jnp.float32) * 0.1
    bias = jax.random.normal(k_b, (F_DIM,), jnp.float32) * 0.1

    # Per-edge source embeddings and edge -> destination-node mapping.
    src_emb = jax.random.normal(k_x, (E, F_DIM), jnp.float32)
    edge_dst = jax.random.randint(k_d, (E,), 0, N_DST, jnp.int32)

    h_node = mean_aggre_forward(src_emb, edge_dst, N_DST, weight, bias)
    h_node = jax.block_until_ready(h_node)

    # Pure-JAX f32 reference of the same forward pass.
    y_ref = jnp.maximum(src_emb @ weight.T + bias, 0.0)
    h_sum = jnp.zeros((N_DST, F_DIM), jnp.float32).at[edge_dst].add(y_ref)
    cnt = jnp.zeros((N_DST,), jnp.float32).at[edge_dst].add(1.0)
    h_ref = h_sum / jnp.maximum(cnt, 1.0)[:, None]

    assert h_node.shape == (N_DST, F_DIM)
    # bf16 MXU inputs (f32 accumulation) -> allow ~1% relative error.
    assert jnp.allclose(h_node, h_ref, atol=2e-2, rtol=2e-2), "mismatch vs reference"

    print("KERNEL_OK")
</pallas_src>

<mosaic_0001>
module attributes {stable_mosaic.version = 11 : i64} {
  func.func @_mean_aggre_kernel(%arg0: i32, %arg1: i32, %arg2: i32, %arg3: memref<2x512xi32, #tpu.memory_space<vmem>>, %arg4: memref<512x128xbf16, #tpu.memory_space<vmem>>, %arg5: memref<128x128xbf16, #tpu.memory_space<vmem>>, %arg6: memref<1x128xf32, #tpu.memory_space<vmem>>, %arg7: memref<24x1xf32, #tpu.memory_space<vmem>>, %arg8: memref<24x128xf32, #tpu.memory_space<vmem>>, %arg9: memref<24x128xf32, #tpu.memory_space<vmem>>) attributes {dimension_semantics = [#tpu.dimension_semantics<parallel>, #tpu.dimension_semantics<parallel>, #tpu.dimension_semantics<arbitrary>], iteration_bounds = array<i64: 1, 1, 2>, scalar_prefetch = 0 : i64, scratch_operands = 1 : i64, tpu.core_type = #tpu.core_type<tc>, window_params = [{pipeline_mode = #tpu.pipeline_mode<synchronous>, transform_indices = @transform_0, window_bounds = array<i64: 2, 512>}, {transform_indices = @transform_1, window_bounds = array<i64: 512, 128>}, {transform_indices = @transform_2, window_bounds = array<i64: 128, 128>}, {transform_indices = @transform_3, window_bounds = array<i64: 1, 128>}, {transform_indices = @transform_4, window_bounds = array<i64: 24, 1>}, {transform_indices = @transform_5, window_bounds = array<i64: 24, 128>}]} {
    %c0_i32 = arith.constant 0 : i32
    %0 = arith.cmpi eq, %arg2, %c0_i32 : i32
    %1 = arith.extui %0 : i1 to i32
    %c0_i32_0 = arith.constant 0 : i32
    %2 = arith.cmpi ne, %1, %c0_i32_0 : i32
    scf.if %2 {
      %cst_14 = arith.constant 0.000000e+00 : f32
      %30 = vector.broadcast %cst_14 : f32 to vector<24x128xf32>
      %c0_15 = arith.constant 0 : index
      %c0_16 = arith.constant 0 : index
      %31 = vector.load %arg9[%c0_15, %c0_16] : memref<24x128xf32, #tpu.memory_space<vmem>>, vector<24x128xf32>
      tpu.vector_store %arg9[%c0_15, %c0_16], %30 {strides = array<i32>} : memref<24x128xf32, #tpu.memory_space<vmem>>, vector<24x128xf32>,
    } else {
    }
    %c0 = arith.constant 0 : index
    %c0_1 = arith.constant 0 : index
    %3 = vector.load %arg4[%c0, %c0_1] : memref<512x128xbf16, #tpu.memory_space<vmem>>, vector<512x128xbf16>
    %c0_2 = arith.constant 0 : index
    %c0_3 = arith.constant 0 : index
    %4 = vector.load %arg5[%c0_2, %c0_3] : memref<128x128xbf16, #tpu.memory_space<vmem>>, vector<128x128xbf16>
    %cst = arith.constant dense<0.000000e+00> : vector<512x128xf32>
    %5 = tpu.matmul %3, %4, %cst {dimension_numbers = #tpu.dot_dimension_numbers<[1], [0], [0], [1], [0, 0, 1, 1], [], []>} : vector<512x128xbf16>, vector<128x128xbf16>, vector<512x128xf32> -> vector<512x128xf32>
    %c0_4 = arith.constant 0 : index
    %c0_5 = arith.constant 0 : index
    %6 = vector.load %arg6[%c0_4, %c0_5] : memref<1x128xf32, #tpu.memory_space<vmem>>, vector<1x128xf32>
    %7 = vector.broadcast %6 : vector<1x128xf32> to vector<512x128xf32>
    %8 = arith.addf %5, %7 : vector<512x128xf32>
    %cst_6 = arith.constant 0.000000e+00 : f32
    %9 = vector.broadcast %cst_6 : f32 to vector<512x128xf32>
    %10 = arith.maximumf %8, %9 : vector<512x128xf32>
    %11 = arith.index_cast %arg2 : i32 to index
    %c0_7 = arith.constant 0 : index
    %12 = vector.load %arg3[%11, %c0_7] : memref<2x512xi32, #tpu.memory_space<vmem>>, vector<1x512xi32>
    %c24_i32 = arith.constant 24 : i32
    %13 = arith.muli %arg0, %c24_i32 : i32
    %14 = tpu.iota {dimensions = array<i32: 0>} : vector<24x512xi32>
    %15 = vector.broadcast %13 : i32 to vector<24x512xi32>
    %16 = arith.addi %14, %15 : vector<24x512xi32>
    %17 = vector.broadcast %12 : vector<1x512xi32> to vector<24x512xi32>
    %18 = arith.cmpi eq, %16, %17 : vector<24x512xi32>
    %19 = arith.extui %18 : vector<24x512xi1> to vector<24x512xi32>
    %20 = arith.sitofp %19 : vector<24x512xi32> to vector<24x512xf32>
    %21 = arith.truncf %20 : vector<24x512xf32> to vector<24x512xbf16>
    %c0_8 = arith.constant 0 : index
    %c0_9 = arith.constant 0 : index
    %22 = vector.load %arg9[%c0_8, %c0_9] : memref<24x128xf32, #tpu.memory_space<vmem>>, vector<24x128xf32>
    %23 = arith.truncf %10 : vector<512x128xf32> to vector<512x128xbf16>
    %cst_10 = arith.constant dense<0.000000e+00> : vector<24x128xf32>
    %24 = tpu.matmul %21, %23, %cst_10 {dimension_numbers = #tpu.dot_dimension_numbers<[1], [0], [0], [1], [0, 0, 1, 1], [], []>} : vector<24x512xbf16>, vector<512x128xbf16>, vector<24x128xf32> -> vector<24x128xf32>
    %25 = arith.addf %22, %24 : vector<24x128xf32>
    %c0_11 = arith.constant 0 : index
    %c0_12 = arith.constant 0 : index
    %26 = vector.load %arg9[%c0_11, %c0_12] : memref<24x128xf32, #tpu.memory_space<vmem>>, vector<24x128xf32>
    tpu.vector_store %arg9[%c0_11, %c0_12], %25 {strides = array<i32>} : memref<24x128xf32, #tpu.memory_space<vmem>>, vector<24x128xf32>,
    %c1_i32 = arith.constant 1 : i32
    %27 = arith.cmpi eq, %arg2, %c1_i32 : i32
    %28 = arith.extui %27 : i1 to i32
    %c0_i32_13 = arith.constant 0 : i32
    %29 = arith.cmpi ne, %28, %c0_i32_13 : i32
    scf.if %29 {
      %c0_14 = arith.constant 0 : index
      %c0_15 = arith.constant 0 : index
      %30 = vector.load %arg9[%c0_14, %c0_15] : memref<24x128xf32, #tpu.memory_space<vmem>>, vector<24x128xf32>
      %c0_16 = arith.constant 0 : index
      %c0_17 = arith.constant 0 : index
      %31 = vector.load %arg7[%c0_16, %c0_17] : memref<24x1xf32, #tpu.memory_space<vmem>>, vector<24x1xf32>
      %32 = vector.broadcast %31 : vector<24x1xf32> to vector<24x128xf32>
      %33 = arith.mulf %30, %32 : vector<24x128xf32>
      %c0_18 = arith.constant 0 : index
      %c0_19 = arith.constant 0 : index
      %34 = vector.load %arg8[%c0_18, %c0_19] : memref<24x128xf32, #tpu.memory_space<vmem>>, vector<24x128xf32>
      tpu.vector_store %arg8[%c0_18, %c0_19], %33 {strides = array<i32>} : memref<24x128xf32, #tpu.memory_space<vmem>>, vector<24x128xf32>,
    } else {
    }
    return
  }
  func.func @transform_0(%arg0: i32, %arg1: i32, %arg2: i32) -> (i32, i32) {
    %c0_i32 = arith.constant 0 : i32
    %c0_i32_0 = arith.constant 0 : i32
    %c0_i32_1 = arith.constant 0 : i32
    return %c0_i32, %c0_i32_0 : i32, i32
  }
  func.func @transform_1(%arg0: i32, %arg1: i32, %arg2: i32) -> (i32, i32) {
    %c0_i32 = arith.constant 0 : i32
    %c0_i32_0 = arith.constant 0 : i32
    return %arg2, %c0_i32 : i32, i32
  }
  func.func @transform_2(%arg0: i32, %arg1: i32, %arg2: i32) -> (i32, i32) {
    %c0_i32 = arith.constant 0 : i32
    %c0_i32_0 = arith.constant 0 : i32
    return %c0_i32, %arg1 : i32, i32
  }
  func.func @transform_3(%arg0: i32, %arg1: i32, %arg2: i32) -> (i32, i32) {
    %c0_i32 = arith.constant 0 : i32
    %c0_i32_0 = arith.constant 0 : i32
    return %c0_i32, %arg1 : i32, i32
  }
  func.func @transform_4(%arg0: i32, %arg1: i32, %arg2: i32) -> (i32, i32) {
    %c0_i32 = arith.constant 0 : i32
    %c0_i32_0 = arith.constant 0 : i32
    return %arg0, %c0_i32 : i32, i32
  }
  func.func @transform_5(%arg0: i32, %arg1: i32, %arg2: i32) -> (i32, i32) {
    %c0_i32 = arith.constant 0 : i32
    return %arg0, %arg1 : i32, i32
  }
}

</mosaic_0001>

<llo_original>
// kernel: tpu_custom_call.1
$region0: #{tpu_custom_call.1}
  #allocation0 [shape = 'u32[]', space=smem, size = 0x4, offset = 0x4, fixed_abs, tag = 'smem constant byte address 0x4 - core index']
  #allocation1 [shape = 'u32[144,128]{1,0:T(1,128)}', space=vmem, size = 0x12000, scoped, tag = 'internal scratch']
  #allocation2 [shape = 'f32[24,128]{1,0:T(8,128)}', space=vmem, size = 0x3000, scoped, tag = 'scratch operand']
  %s0 = inlined_call_operand.vmem [shape: s32[2,512], index: 0, kind: input, shape index: {}]
  %s1 = inlined_call_operand.hbm [shape: bf16[1024,128], index: 1, kind: input, shape index: {}]
  %s2 = inlined_call_operand.hbm [shape: bf16[128,128], index: 2, kind: input, shape index: {}]
  %s3 = inlined_call_operand.vmem [shape: f32[1,128], index: 3, kind: input, shape index: {}]
  %s4 = inlined_call_operand.vmem [shape: f32[24,1], index: 4, kind: input, shape index: {}]
  %s5 = inlined_call_operand.hbm [shape: f32[24,128], index: 5, kind: output, shape index: {}]
  %s6 = sld [smem:[#allocation0]]
  $region69: #{tpu_custom_call.1} parent=0
    _
  %s8 = ssub.s32 1, %s6
  %s9 = scalar_select 0, %s8, %s6
  $region1: #{tpu_custom_call.1} parent=0
    #allocation3 [shape = 'u8[262144]{0}', space=vmem, size = 0x40000, scoped, tag = 'input window, operand 1']
    #allocation4 [shape = 's32[2]{0}', space=sflag, size = 0x8, scoped, tag = 'scoped memory for tpu_custom_call.1']
    #allocation5 [shape = 's32[2]{0}', space=sflag, size = 0x8, scoped, tag = 'scoped memory for tpu_custom_call.1']
    #allocation6 [shape = 'u8[32768]{0}', space=vmem, size = 0x8000, scoped, tag = 'input window, operand 2, single buffered']
    #allocation7 [shape = 's32[1]{0}', space=sflag, size = 0x4, scoped, tag = 'scoped memory for tpu_custom_call.1']
    #allocation8 [shape = 'u8[12288]{0}', space=vmem, size = 0x3000, scoped, tag = 'output window, operand 0, single buffered']
    %10 = vsyncpa [#allocation4], 0
    %s11 = scalar_lea.sflag [#allocation4], 1
    %12 = vsyncpa %s11, 0
    %13 = vsyncpa [#allocation7], 0
    %14 = vsyncpa [#allocation5], 0
    loop: start=0, step=1, limit=4
    $region2: #{tpu_custom_call.1} parent=1 // loop_pre_header
      _
    $region3: #{tpu_custom_call.1} parent=1 // loop_header
      %s16 = sphi 0, %s20
      %p17 = scmp.ge.s32.totalorder %s16, 4
      %s23 = sphi 0, %s42
      %s24 = sphi 0, %s38
      %s25 = sphi 0, %s34
      %s26 = sphi 0, %s23
      %s27 = sphi 0, %s24
      %s28 = sphi 0, %s25
      %s29 = sphi 0, %s26
      %s30 = sphi 0, %s27
      %s31 = sphi 0, %s28
      %s43 = sphi 0, %s43
      %s45 = sphi 0, %s43
      %s46 = sphi 0, %s45
      %s60 = sphi 0, %s46
      %s66 = sphi 0, %s68
      %s69 = sphi 0, %s66
      %s70 = sphi 0, %s69
      %s86 = sphi 0, %s70
      %s92 = sphi 0, %s94
      %s95 = sphi 0, %s92
      %s96 = sphi 0, %s95
      %s112 = sphi 0, %s96
      %s118 = sphi 0, %s120
      %s121 = sphi 0, %s118
      %s122 = sphi 0, %s121
      %s138 = sphi 0, %s122
      %s144 = sphi 0, %s146
      %s147 = sphi 0, %s144
      %s148 = sphi 0, %s147
      %s164 = sphi 0, %s148
      %s172 = sphi 0, %s174
      %s175 = sphi 0, %s172
      %s176 = sphi 0, %s175
      %s192 = sphi 0, %s176
    $region4: #{tpu_custom_call.1} parent=1 // loop_header_branch
      %19 = sbr.rel (%p17) target = $region8
    $region5: #{tpu_custom_call.1} parent=1 // loop_body
      %s21 = ssub.s32 %s16, 1
      %s22 = ssub.s32 %s16, 2
      %s32 = sadd.s32 1, %s25
      %p33 = scmp.ge.s32.totalorder %s32, 2
      %s34 = scalar_select %p33, 0, %s32
      %s35 = sadd.s32 1, %s24
      %s36 = scalar_select %p33, %s35, %s24
      %p37 = scmp.ge.s32.totalorder %s36, 1
      %s38 = scalar_select %p37, 0, %s36
      %s39 = sadd.s32 1, %s23
      %s40 = scalar_select %p37, %s39, %s23
      %p41 = scmp.ge.s32.totalorder %s40, 1
      %s42 = scalar_select %p41, 0, %s40
      %s44 = sadd.s32 %s43, 1
      %p47 = scmp.eq.s32.totalorder %s16, 1
      %p48 = scmp.ne.s32.totalorder %s43, %s45
      %p49 = scmp.eq.s32.totalorder %s16, 0
      %p50 = por %p48, %p49
      %p51 = scmp.ne.s32.totalorder %s43, %s45
      %p52 = scmp.eq.s32.totalorder %s21, 1
      %p53 = por %p51, %p52
      %p54 = scmp.ne.s32.totalorder %s45, %s46
      %p55 = scmp.eq.s32.totalorder %s21, 0
      %p56 = por %p54, %p55
      %p57 = scmp.ne.s32.totalorder %s45, %s46
      %p58 = scmp.eq.s32.totalorder %s22, 1
      %p59 = por %p57, %p58
      %p61 = scmp.ne.s32.totalorder %s46, %s60
      %p62 = scmp.eq.s32.totalorder %s22, 0
      %p63 = por %p61, %p62
      %s64 = ssub.s32 %s25, %s34
      %p65 = scmp.eq.s32.totalorder %s64, 0
      %s67 = sadd.s32 %s66, 1
      %s68 = scalar_select %p65, %s66, %s67
      %p71 = pneg %p65
      %p72 = scmp.eq.s32.totalorder %s16, 1
      %p73 = por %p71, %p72
      %p74 = scmp.ne.s32.totalorder %s66, %s69
      %p75 = scmp.eq.s32.totalorder %s16, 0
      %p76 = por %p74, %p75
      %p77 = scmp.ne.s32.totalorder %s66, %s69
      %p78 = scmp.eq.s32.totalorder %s21, 1
      %p79 = por %p77, %p78
      %p80 = scmp.ne.s32.totalorder %s69, %s70
      %p81 = scmp.eq.s32.totalorder %s21, 0
      %p82 = por %p80, %p81
      %p83 = scmp.ne.s32.totalorder %s69, %s70
      %p84 = scmp.eq.s32.totalorder %s22, 1
      %p85 = por %p83, %p84
      %p87 = scmp.ne.s32.totalorder %s70, %s86
      %p88 = scmp.eq.s32.totalorder %s22, 0
      %p89 = por %p87, %p88
      %s90 = ssub.s32 %s24, %s38
      %p91 = scmp.eq.s32.totalorder %s90, 0
      %s93 = sadd.s32 %s92, 1
      %s94 = scalar_select %p91, %s92, %s93
      %p97 = pneg %p91
      %p98 = scmp.eq.s32.totalorder %s16, 1
      %p99 = por %p97, %p98
      %p100 = scmp.ne.s32.totalorder %s92, %s95
      %p101 = scmp.eq.s32.totalorder %s16, 0
      %p102 = por %p100, %p101
      %p103 = scmp.ne.s32.totalorder %s92, %s95
      %p104 = scmp.eq.s32.totalorder %s21, 1
      %p105 = por %p103, %p104
      %p106 = scmp.ne.s32.totalorder %s95, %s96
      %p107 = scmp.eq.s32.totalorder %s21, 0
      %p108 = por %p106, %p107
      %p109 = scmp.ne.s32.totalorder %s95, %s96
      %p110 = scmp.eq.s32.totalorder %s22, 1
      %p111 = por %p109, %p110
      %p113 = scmp.ne.s32.totalorder %s96, %s112
      %p114 = scmp.eq.s32.totalorder %s22, 0
      %p115 = por %p113, %p114
      %s116 = ssub.s32 %s24, %s38
      %p117 = scmp.eq.s32.totalorder %s116, 0
      %s119 = sadd.s32 %s118, 1
      %s120 = scalar_select %p117, %s118, %s119
      %p123 = pneg %p117
      %p124 = scmp.eq.s32.totalorder %s16, 1
      %p125 = por %p123, %p124
      %p126 = scmp.ne.s32.totalorder %s118, %s121
      %p127 = scmp.eq.s32.totalorder %s16, 0
      %p128 = por %p126, %p127
      %p129 = scmp.ne.s32.totalorder %s118, %s121
      %p130 = scmp.eq.s32.totalorder %s21, 1
      %p131 = por %p129, %p130
      %p132 = scmp.ne.s32.totalorder %s121, %s122
      %p133 = scmp.eq.s32.totalorder %s21, 0
      %p134 = por %p132, %p133
      %p135 = scmp.ne.s32.totalorder %s121, %s122
      %p136 = scmp.eq.s32.totalorder %s22, 1
      %p137 = por %p135, %p136
      %p139 = scmp.ne.s32.totalorder %s122, %s138
      %p140 = scmp.eq.s32.totalorder %s22, 0
      %p141 = por %p139, %p140
      %s142 = ssub.s32 %s23, %s42
      %p143 = scmp.eq.s32.totalorder %s142, 0
      %s145 = sadd.s32 %s144, 1
      %s146 = scalar_select %p143, %s144, %s145
      %p149 = pneg %p143
      %p150 = scmp.eq.s32.totalorder %s16, 1
      %p151 = por %p149, %p150
      %p152 = scmp.ne.s32.totalorder %s144, %s147
      %p153 = scmp.eq.s32.totalorder %s16, 0
      %p154 = por %p152, %p153
      %p155 = scmp.ne.s32.totalorder %s144, %s147
      %p156 = scmp.eq.s32.totalorder %s21, 1
      %p157 = por %p155, %p156
      %p158 = scmp.ne.s32.totalorder %s147, %s148
      %p159 = scmp.eq.s32.totalorder %s21, 0
      %p160 = por %p158, %p159
      %p161 = scmp.ne.s32.totalorder %s147, %s148
      %p162 = scmp.eq.s32.totalorder %s22, 1
      %p163 = por %p161, %p162
      %p165 = scmp.ne.s32.totalorder %s148, %s164
      %p166 = scmp.eq.s32.totalorder %s22, 0
      %p167 = por %p165, %p166
      %s168 = ssub.s32 %s23, %s42
      %s169 = ssub.s32 %s24, %s38
      %s170 = sor.u32 %s168, %s169
      %p171 = scmp.eq.s32.totalorder %s170, 0
      %s173 = sadd.s32 %s172, 1
      %s174 = scalar_select %p171, %s172, %s173
      %p177 = pneg %p171
      %p178 = scmp.eq.s32.totalorder %s16, 1
      %p179 = por %p177, %p178
      %p180 = scmp.ne.s32.totalorder %s172, %s175
      %p181 = scmp.eq.s32.totalorder %s16, 0
      %p182 = por %p180, %p181
      %p183 = scmp.ne.s32.totalorder %s172, %s175
      %p184 = scmp.eq.s32.totalorder %s21, 1
      %p185 = por %p183, %p184
      %p186 = scmp.ne.s32.totalorder %s175, %s176
      %p187 = scmp.eq.s32.totalorder %s21, 0
      %p188 = por %p186, %p187
      %p189 = scmp.ne.s32.totalorder %s175, %s176
      %p190 = scmp.eq.s32.totalorder %s22, 1
      %p191 = por %p189, %p190
      %p193 = scmp.ne.s32.totalorder %s176, %s192
      %p194 = scmp.eq.s32.totalorder %s22, 0
      %p195 = por %p193, %p194
      %p196 = scmp.le.s32.totalorder 1, %s16
      %p197 = scmp.lt.s32.totalorder %s16, 3
      %p198 = pnand %p196, %p197
      %p199 = pneg %p198
      // Predicated region
      $region9: #{tpu_custom_call.1} parent=5 // pred_check
        _
      $region10: #{tpu_custom_call.1} parent=5 // pred_check_branch
        %201 = sbr.rel (%p198) target = $region12
      $region11: #{tpu_custom_call.1} parent=5 // pred_region
        %s202 = ssub.s32 %s16, 1
        // Predicated region
        $region13: #{tpu_custom_call.1} parent=11 // pred_check
          %p203 = pneg %p56
        $region14: #{tpu_custom_call.1} parent=11 // pred_check_branch
          %205 = sbr.rel (%p203) target = $region16
        $region15: #{tpu_custom_call.1} parent=11 // pred_region
          _
        $region16: #{tpu_custom_call.1} parent=11 // pred_fallthru
          _
        // Predicated region
        $region17: #{tpu_custom_call.1} parent=11 // pred_check
          %p206 = pneg %p108
        $region18: #{tpu_custom_call.1} parent=11 // pred_check_branch
          %208 = sbr.rel (%p206) target = $region20
        $region19: #{tpu_custom_call.1} parent=11 // pred_region
          %s210 = ssub.s32 1024, 1024
          %211 = vsyncadd [#allocation7], %s210
          %s212 = smul.addr %s27, 64
          %s213 = scalar_lea.hbm %s2, %s212
          %s214 = sshll.u32 [#allocation6], 4
          %s215 = int_to_ptr.vmem [resolvable:$true] %s214
          %220 = dma.hbm_to_vmem [thread:$0]  %s213, 1024, %s215, [#allocation7], 64, 64, 4
        $region20: #{tpu_custom_call.1} parent=11 // pred_fallthru
          _
        // Predicated region
        $region21: #{tpu_custom_call.1} parent=11 // pred_check
          %p221 = pneg %p134
        $region22: #{tpu_custom_call.1} parent=11 // pred_check_branch
          %223 = sbr.rel (%p221) target = $region24
        $region23: #{tpu_custom_call.1} parent=11 // pred_region
          %p224 = scmp.lt.s32.totalorder %s27, 0
          %s225 = scalar_select %p224, %s27, 0
          %s226 = scalar_lea.vmem %s3, %s225
        $region24: #{tpu_custom_call.1} parent=11 // pred_fallthru
          _
        // Predicated region
        $region25: #{tpu_custom_call.1} parent=11 // pred_check
          %p227 = pneg %p160
        $region26: #{tpu_custom_call.1} parent=11 // pred_check_branch
          %229 = sbr.rel (%p227) target = $region28
        $region27: #{tpu_custom_call.1} parent=11 // pred_region
          %s230 = smul.u32 3, %s26
          %p231 = scmp.lt.s32.totalorder %s230, 2
          %s232 = scalar_select %p231, %s230, 2
          %s233 = smul.addr %s232, 8
          %s234 = scalar_lea.vmem %s4, %s233
          %s235 = smul.u32 3, %s26
        $region28: #{tpu_custom_call.1} parent=11 // pred_fallthru
          _
      $region12: #{tpu_custom_call.1} parent=5 // pred_fallthru
        _
      %p236 = scmp.lt.s32.totalorder %s16, 2
      // Predicated region
      $region29: #{tpu_custom_call.1} parent=5 // pred_check
        %p237 = pneg %p236
      $region30: #{tpu_custom_call.1} parent=5 // pred_check_branch
        %239 = sbr.rel (%p237) target = $region32
      $region31: #{tpu_custom_call.1} parent=5 // pred_region
        // Predicated region
        $region33: #{tpu_custom_call.1} parent=31 // pred_check
          %p240 = pneg %p76
        $region34: #{tpu_custom_call.1} parent=31 // pred_check_branch
          %242 = sbr.rel (%p240) target = $region36
        $region35: #{tpu_custom_call.1} parent=31 // pred_region
          %s243 = sand.u32 %s66, 1
          %s244 = scalar_lea.sflag [#allocation4], %s243
          %s245 = sand.u32 %s66, 1
          %s246 = smul.addr %s245, 256
          %s247 = scalar_lea.vmem [#allocation3], %s246
          %s248 = smul.u32 64, %s25
          %s250 = ssub.s32 4096, 4096
          %251 = vsyncadd %s244, %s250
          %s252 = smul.addr %s248, 64
          %s253 = scalar_lea.hbm %s1, %s252
          %s254 = sshll.u32 %s247, 4
          %s255 = int_to_ptr.vmem [resolvable:$true] %s254
          %260 = dma.hbm_to_vmem [thread:$0]  %s253, 4096, %s255, %s244, 64, 64, 4
        $region36: #{tpu_custom_call.1} parent=31 // pred_fallthru
          _
      $region32: #{tpu_custom_call.1} parent=5 // pred_fallthru
        _
      %p261 = scmp.le.s32.totalorder 1, %s16
      %p262 = scmp.lt.s32.totalorder %s16, 3
      %p263 = pnand %p261, %p262
      %p264 = pneg %p263
      // Predicated region
      $region37: #{tpu_custom_call.1} parent=5 // pred_check
        _
      $region38: #{tpu_custom_call.1} parent=5 // pred_check_branch
        %266 = sbr.rel (%p263) target = $region40
      $region39: #{tpu_custom_call.1} parent=5 // pred_region
        %s267 = ssub.s32 %s16, 1
        %s268 = sand.u32 %s69, 1
        %s269 = scalar_lea.sflag [#allocation4], %s268
        %s270 = sand.u32 %s69, 1
        %s271 = smul.addr %s270, 256
        %s272 = scalar_lea.vmem [#allocation3], %s271
        // Predicated region
        $region41: #{tpu_custom_call.1} parent=39 // pred_check
          %p273 = pneg %p82
        $region42: #{tpu_custom_call.1} parent=39 // pred_check_branch
          %275 = sbr.rel (%p273) target = $region44
        $region43: #{tpu_custom_call.1} parent=39 // pred_region
          %276 = dma.done %s269, 4096
        $region44: #{tpu_custom_call.1} parent=39 // pred_fallthru
          _
        // Predicated region
        $region45: #{tpu_custom_call.1} parent=39 // pred_check
          %p277 = pneg %p108
        $region46: #{tpu_custom_call.1} parent=39 // pred_check_branch
          %279 = sbr.rel (%p277) target = $region48
        $region47: #{tpu_custom_call.1} parent=39 // pred_region
          %280 = dma.done [#allocation7], 1024
        $region48: #{tpu_custom_call.1} parent=39 // pred_fallthru
          _
        %p281 = pneg %p56
        %p282 = pneg %p53
        %s283 = sand.u32 %s69, 1
        %s284 = scalar_lea.sflag [#allocation4], %s283
        %s285 = sand.u32 %s69, 1
        %s286 = smul.addr %s285, 256
        %s287 = scalar_lea.vmem [#allocation3], %s286
        %p288 = pneg %p82
        %p289 = pneg %p79
        %p290 = pneg %p108
        %p291 = pneg %p105
        %p292 = scmp.lt.s32.totalorder %s27, 0
        %s293 = scalar_select %p292, %s27, 0
        %s294 = scalar_lea.vmem %s3, %s293
        %p295 = pneg %p134
        %p296 = pneg %p131
        %s297 = smul.u32 3, %s26
        %p298 = scmp.lt.s32.totalorder %s297, 2
        %s299 = scalar_select %p298, %s297, 2
        %s300 = smul.addr %s299, 8
        %s301 = scalar_lea.vmem %s4, %s300
        %p302 = pneg %p160
        %p303 = pneg %p157
        %p304 = pneg %p188
        %p305 = pneg %p185
        %s306 = smul.u32 64, %s28
        %p307 = scmp.lt.s32.totalorder %s27, 0
        %s308 = scalar_select %p307, %s27, 0
        %s309 = scalar_lea.vmem %s3, %s308
        %s310 = smul.u32 3, %s26
        %p311 = scmp.lt.s32.totalorder %s310, 2
        %s312 = scalar_select %p311, %s310, 2
        %s313 = smul.addr %s312, 8
        %s314 = scalar_lea.vmem %s4, %s313
        %s315 = smul.u32 3, %s26
        %s316 = smul.u32 3, %s26
        %p318 = scmp.eq.s32.totalorder %s28, 0
        // Predicated region
        $region49: #{tpu_custom_call.1} parent=39 // pred_check
          %p319 = pneg %p318
        $region50: #{tpu_custom_call.1} parent=39 // pred_check_branch
          %321 = sbr.rel (%p319) target = $region52
        $region51: #{tpu_custom_call.1} parent=39 // pred_region
          %322 = vst [vmem:[#allocation2] sm:$0xff] 0.0
          %323 = vst [vmem:[#allocation2 + $0x8] sm:$0xff] 0.0
          %324 = vst [vmem:[#allocation2 + $0x10] sm:$0xff] 0.0
        $region52: #{tpu_custom_call.1} parent=39 // pred_fallthru
          _
        %v325 = vld [vmem:[%s272] sm:$0xf]
        %v326 = vld [vmem:[%s272 + $0x4] sm:$0xf]
        %v327 = vld [vmem:[%s272 + $0x8] sm:$0xf]
        %v328 = vld [vmem:[%s272 + $0xc] sm:$0xf]
        %v329 = vld [vmem:[%s272 + $0x10] sm:$0xf]
        %v330 = vld [vmem:[%s272 + $0x14] sm:$0xf]
        %v331 = vld [vmem:[%s272 + $0x18] sm:$0xf]
        %v332 = vld [vmem:[%s272 + $0x1c] sm:$0xf]
        %v333 = vld [vmem:[%s272 + $0x20] sm:$0xf]
        %v334 = vld [vmem:[%s272 + $0x24] sm:$0xf]
        %v335 = vld [vmem:[%s272 + $0x28] sm:$0xf]
        %v336 = vld [vmem:[%s272 + $0x2c] sm:$0xf]
        %v337 = vld [vmem:[%s272 + $0x30] sm:$0xf]
        %v338 = vld [vmem:[%s272 + $0x34] sm:$0xf]
        %v339 = vld [vmem:[%s272 + $0x38] sm:$0xf]
        %v340 = vld [vmem:[%s272 + $0x3c] sm:$0xf]
        %v341 = vld [vmem:[%s272 + $0x40] sm:$0xf]
        %v342 = vld [vmem:[%s272 + $0x44] sm:$0xf]
        %v343 = vld [vmem:[%s272 + $0x48] sm:$0xf]
        %v344 = vld [vmem:[%s272 + $0x4c] sm:$0xf]
        %v345 = vld [vmem:[%s272 + $0x50] sm:$0xf]
        %v346 = vld [vmem:[%s272 + $0x54] sm:$0xf]
        %v347 = vld [vmem:[%s272 + $0x58] sm:$0xf]
        %v348 = vld [vmem:[%s272 + $0x5c] sm:$0xf]
        %v349 = vld [vmem:[%s272 + $0x60] sm:$0xf]
        %v350 = vld [vmem:[%s272 + $0x64] sm:$0xf]
        %v351 = vld [vmem:[%s272 + $0x68] sm:$0xf]
        %v352 = vld [vmem:[%s272 + $0x6c] sm:$0xf]
        %v353 = vld [vmem:[%s272 + $0x70] sm:$0xf]
        %v354 = vld [vmem:[%s272 + $0x74] sm:$0xf]
        %v355 = vld [vmem:[%s272 + $0x78] sm:$0xf]
        %v356 = vld [vmem:[%s272 + $0x7c] sm:$0xf]
        %v357 = vld [vmem:[%s272 + $0x80] sm:$0xf]
        %v358 = vld [vmem:[%s272 + $0x84] sm:$0xf]
        %v359 = vld [vmem:[%s272 + $0x88] sm:$0xf]
        %v360 = vld [vmem:[%s272 + $0x8c] sm:$0xf]
        %v361 = vld [vmem:[%s272 + $0x90] sm:$0xf]
        %v362 = vld [vmem:[%s272 + $0x94] sm:$0xf]
        %v363 = vld [vmem:[%s272 + $0x98] sm:$0xf]
        %v364 = vld [vmem:[%s272 + $0x9c] sm:$0xf]
        %v365 = vld [vmem:[%s272 + $0xa0] sm:$0xf]
        %v366 = vld [vmem:[%s272 + $0xa4] sm:$0xf]
        %v367 = vld [vmem:[%s272 + $0xa8] sm:$0xf]
        %v368 = vld [vmem:[%s272 + $0xac] sm:$0xf]
        %v369 = vld [vmem:[%s272 + $0xb0] sm:$0xf]
        %v370 = vld [vmem:[%s272 + $0xb4] sm:$0xf]
        %v371 = vld [vmem:[%s272 + $0xb8] sm:$0xf]
        %v372 = vld [vmem:[%s272 + $0xbc] sm:$0xf]
        %v373 = vld [vmem:[%s272 + $0xc0] sm:$0xf]
        %v374 = vld [vmem:[%s272 + $0xc4] sm:$0xf]
        %v375 = vld [vmem:[%s272 + $0xc8] sm:$0xf]
        %v376 = vld [vmem:[%s272 + $0xcc] sm:$0xf]
        %v377 = vld [vmem:[%s272 + $0xd0] sm:$0xf]
        %v378 = vld [vmem:[%s272 + $0xd4] sm:$0xf]
        %v379 = vld [vmem:[%s272 + $0xd8] sm:$0xf]
        %v380 = vld [vmem:[%s272 + $0xdc] sm:$0xf]
        %v381 = vld [vmem:[%s272 + $0xe0] sm:$0xf]
        %v382 = vld [vmem:[%s272 + $0xe4] sm:$0xf]
        %v383 = vld [vmem:[%s272 + $0xe8] sm:$0xf]
        %v384 = vld [vmem:[%s272 + $0xec] sm:$0xf]
        %v385 = vld [vmem:[%s272 + $0xf0] sm:$0xf]
        %v386 = vld [vmem:[%s272 + $0xf4] sm:$0xf]
        %v387 = vld [vmem:[%s272 + $0xf8] sm:$0xf]
        %v388 = vld [vmem:[%s272 + $0xfc] sm:$0xf]
        %v389 = vld [vmem:[#allocation6] sm:$0xf]
        %v390 = vld [vmem:[#allocation6 + $0x4] sm:$0xf]
        %v391 = vld [vmem:[#allocation6 + $0x8] sm:$0xf]
        %v392 = vld [vmem:[#allocation6 + $0xc] sm:$0xf]
        %v393 = vld [vmem:[#allocation6 + $0x10] sm:$0xf]
        %v394 = vld [vmem:[#allocation6 + $0x14] sm:$0xf]
        %v395 = vld [vmem:[#allocation6 + $0x18] sm:$0xf]
        %v396 = vld [vmem:[#allocation6 + $0x1c] sm:$0xf]
        %v397 = vld [vmem:[#allocation6 + $0x20] sm:$0xf]
        %v398 = vld [vmem:[#allocation6 + $0x24] sm:$0xf]
        %v399 = vld [vmem:[#allocation6 + $0x28] sm:$0xf]
        %v400 = vld [vmem:[#allocation6 + $0x2c] sm:$0xf]
        %v401 = vld [vmem:[#allocation6 + $0x30] sm:$0xf]
        %v402 = vld [vmem:[#allocation6 + $0x34] sm:$0xf]
        %v403 = vld [vmem:[#allocation6 + $0x38] sm:$0xf]
        %v404 = vld [vmem:[#allocation6 + $0x3c] sm:$0xf]
        %v405 = vld [vmem:[%s309] sm:$0x1]
        %v407 = vlaneseq
        %v408 = vshrl.u32 %v407, 7
        %v409 = vsub.s32 0, %v408
        %v410 = vrot.slane %v405, %v409
        %v476 = vunpack.c.l.b16 %v325
        %v477 = vunpack.c.l.b16 %v326
        %v478 = vunpack.c.l.b16 %v327
        %v479 = vunpack.c.l.b16 %v328
        %v480 = vunpack.c.l.b16 %v329
        %v481 = vunpack.c.l.b16 %v330
        %v482 = vunpack.c.l.b16 %v331
        %v483 = vunpack.c.l.b16 %v332
        %v484 = vunpack.c.l.b16 %v333
        %v485 = vunpack.c.l.b16 %v334
        %v486 = vunpack.c.l.b16 %v335
        %v487 = vunpack.c.l.b16 %v336
        %v488 = vunpack.c.l.b16 %v337
        %v489 = vunpack.c.l.b16 %v338
        %v490 = vunpack.c.l.b16 %v339
        %v491 = vunpack.c.l.b16 %v340
        %v492 = vunpack.c.l.b16 %v341
        %v493 = vunpack.c.l.b16 %v342
        %v494 = vunpack.c.l.b16 %v343
        %v495 = vunpack.c.l.b16 %v344
        %v496 = vunpack.c.l.b16 %v345
        %v497 = vunpack.c.l.b16 %v346
        %v498 = vunpack.c.l.b16 %v347
        %v499 = vunpack.c.l.b16 %v348
        %v500 = vunpack.c.l.b16 %v349
        %v501 = vunpack.c.l.b16 %v350
        %v502 = vunpack.c.l.b16 %v351
        %v503 = vunpack.c.l.b16 %v352
        %v504 = vunpack.c.l.b16 %v353
        %v505 = vunpack.c.l.b16 %v354
        %v506 = vunpack.c.l.b16 %v355
        %v507 = vunpack.c.l.b16 %v356
        %v508 = vunpack.c.l.b16 %v357
        %v509 = vunpack.c.l.b16 %v358
        %v510 = vunpack.c.l.b16 %v359
        %v511 = vunpack.c.l.b16 %v360
        %v512 = vunpack.c.l.b16 %v361
        %v513 = vunpack.c.l.b16 %v362
        %v514 = vunpack.c.l.b16 %v363
        %v515 = vunpack.c.l.b16 %v364
        %v516 = vunpack.c.l.b16 %v365
        %v517 = vunpack.c.l.b16 %v366
        %v518 = vunpack.c.l.b16 %v367
        %v519 = vunpack.c.l.b16 %v368
        %v520 = vunpack.c.l.b16 %v369
        %v521 = vunpack.c.l.b16 %v370
        %v522 = vunpack.c.l.b16 %v371
        %v523 = vunpack.c.l.b16 %v372
        %v524 = vunpack.c.l.b16 %v373
        %v525 = vunpack.c.l.b16 %v374
        %v526 = vunpack.c.l.b16 %v375
        %v527 = vunpack.c.l.b16 %v376
        %v528 = vunpack.c.l.b16 %v377
        %v529 = vunpack.c.l.b16 %v378
        %v530 = vunpack.c.l.b16 %v379
        %v531 = vunpack.c.l.b16 %v380
        %v532 = vunpack.c.l.b16 %v381
        %v533 = vunpack.c.l.b16 %v382
        %v534 = vunpack.c.l.b16 %v383
        %v535 = vunpack.c.l.b16 %v384
        %v536 = vunpack.c.l.b16 %v385
        %v537 = vunpack.c.l.b16 %v386
        %v538 = vunpack.c.l.b16 %v387
        %v539 = vunpack.c.l.b16 %v388
        %v540 = vpack.c.b16 %v477, %v476
        %v541 = vpack.c.b16 %v479, %v478
        %v542 = vpack.c.b16 %v481, %v480
        %v543 = vpack.c.b16 %v483, %v482
        %v544 = vpack.c.b16 %v485, %v484
        %v545 = vpack.c.b16 %v487, %v486
        %v546 = vpack.c.b16 %v489, %v488
        %v547 = vpack.c.b16 %v491, %v490
        %v548 = vpack.c.b16 %v493, %v492
        %v549 = vpack.c.b16 %v495, %v494
        %v550 = vpack.c.b16 %v497, %v496
        %v551 = vpack.c.b16 %v499, %v498
        %v552 = vpack.c.b16 %v501, %v500
        %v553 = vpack.c.b16 %v503, %v502
        %v554 = vpack.c.b16 %v505, %v504
        %v555 = vpack.c.b16 %v507, %v506
        %v556 = vpack.c.b16 %v509, %v508
        %v557 = vpack.c.b16 %v511, %v510
        %v558 = vpack.c.b16 %v513, %v512
        %v559 = vpack.c.b16 %v515, %v514
        %v560 = vpack.c.b16 %v517, %v516
        %v561 = vpack.c.b16 %v519, %v518
        %v562 = vpack.c.b16 %v521, %v520
        %v563 = vpack.c.b16 %v523, %v522
        %v564 = vpack.c.b16 %v525, %v524
        %v565 = vpack.c.b16 %v527, %v526
        %v566 = vpack.c.b16 %v529, %v528
        %v567 = vpack.c.b16 %v531, %v530
        %v568 = vpack.c.b16 %v533, %v532
        %v569 = vpack.c.b16 %v535, %v534
        %v570 = vpack.c.b16 %v537, %v536
        %v571 = vpack.c.b16 %v539, %v538
        %v620 = vunpack.c.l.b16 %v389
        %v621 = vunpack.c.l.b16 %v390
        %v622 = vunpack.c.l.b16 %v391
        %v623 = vunpack.c.l.b16 %v392
        %v624 = vunpack.c.l.b16 %v393
        %v625 = vunpack.c.l.b16 %v394
        %v626 = vunpack.c.l.b16 %v395
        %v627 = vunpack.c.l.b16 %v396
        %v628 = vunpack.c.l.b16 %v397
        %v629 = vunpack.c.l.b16 %v398
        %v630 = vunpack.c.l.b16 %v399
        %v631 = vunpack.c.l.b16 %v400
        %v632 = vunpack.c.l.b16 %v401
        %v633 = vunpack.c.l.b16 %v402
        %v634 = vunpack.c.l.b16 %v403
        %v635 = vunpack.c.l.b16 %v404
        %v636 = vpack.c.b16 %v621, %v620
        %v637 = vpack.c.b16 %v623, %v622
        %v638 = vpack.c.b16 %v625, %v624
        %v639 = vpack.c.b16 %v627, %v626
        %v640 = vpack.c.b16 %v629, %v628
        %v641 = vpack.c.b16 %v631, %v630
        %v642 = vpack.c.b16 %v633, %v632
        %v643 = vpack.c.b16 %v635, %v634
        %652 = vmatprep.subr.bf16.mxu0 0
        %653 = vmatpush1.bf16.msra.mxu0 %v636
        %654 = vmatprep.subr.bf16.mxu0 0
        %655 = vmatpush1.bf16.msra.mxu0 %v637
        %656 = vmatprep.subr.bf16.mxu0 0
        %657 = vmatpush1.bf16.msra.mxu0 %v638
        %658 = vmatprep.subr.bf16.mxu0 0
        %659 = vmatpush1.bf16.msra.mxu0 %v639
        %660 = vmatprep.subr.bf16.mxu0 0
        %661 = vmatpush1.bf16.msra.mxu0 %v640
        %662 = vmatprep.subr.bf16.mxu0 0
        %663 = vmatpush1.bf16.msra.mxu0 %v641
        %664 = vmatprep.subr.bf16.mxu0 0
        %665 = vmatpush1.bf16.msra.mxu0 %v642
        %666 = vmatprep.subr.bf16.mxu0 0
        %667 = vmatpush1.bf16.msra.mxu0 %v643
        %668 = vmatprep.subr.bf16.mxu0 0
        %669 = vmatpush1.bf16.msra.mxu0 0
        %670 = vmatprep.subr.bf16.mxu0 0
        %671 = vmatpush1.bf16.msra.mxu0 0
        %672 = vmatprep.subr.bf16.mxu0 0
        %673 = vmatpush1.bf16.msra.mxu0 0
        %674 = vmatprep.subr.bf16.mxu0 0
        %675 = vmatpush1.bf16.msra.mxu0 0
        %676 = vmatprep.subr.bf16.mxu0 0
        %677 = vmatpush1.bf16.msra.mxu0 0
        %678 = vmatprep.subr.bf16.mxu0 0
        %679 = vmatpush1.bf16.msra.mxu0 0
        %680 = vmatprep.subr.bf16.mxu0 0
        %681 = vmatpush1.bf16.msra.mxu0 0
        %682 = vmatprep.subr.bf16.mxu0 0
        %683 = vmatpush1.bf16.msra.mxu0 0
        %684 = vmatprep.mubr.bf16.mxu0 0
        %685 = vmatmul.mubr.bf16.gmra.mrb[0].mxu0 %v540
        %v686 = vpop.f32.mrb[0].mxu0
        %v687 = vadd.f32 %v410, %v686
        %v688 = vpop.f32.mrb[0].mxu0
        %v689 = vpop.f32.mrb[0].mxu0
        %v690 = vadd.f32 %v410, %v689
        %v691 = vpop.f32.mrb[0].mxu0
        %692 = vmatprep.mubr.bf16.mxu0 0
        %693 = vmatmul.mubr.bf16.gmra.mrb[0].mxu0 %v541
        %v694 = vpop.f32.mrb[0].mxu0
        %v695 = vadd.f32 %v410, %v694
        %v696 = vpop.f32.mrb[0].mxu0
        %v697 = vpop.f32.mrb[0].mxu0
        %v698 = vadd.f32 %v410, %v697
        %v699 = vpop.f32.mrb[0].mxu0
        %700 = vmatprep.mubr.bf16.mxu0 0
        %701 = vmatmul.mubr.bf16.gmra.mrb[0].mxu0 %v542
        %v702 = vpop.f32.mrb[0].mxu0
        %v703 = vadd.f32 %v410, %v702
        %v704 = vpop.f32.mrb[0].mxu0
        %v705 = vpop.f32.mrb[0].mxu0
        %v706 = vadd.f32 %v410, %v705
        %v707 = vpop.f32.mrb[0].mxu0
        %708 = vmatprep.mubr.bf16.mxu0 0
        %709 = vmatmul.mubr.bf16.gmra.mrb[0].mxu0 %v543
        %v710 = vpop.f32.mrb[0].mxu0
        %v711 = vadd.f32 %v410, %v710
        %v712 = vpop.f32.mrb[0].mxu0
        %v713 = vpop.f32.mrb[0].mxu0
        %v714 = vadd.f32 %v410, %v713
        %v715 = vpop.f32.mrb[0].mxu0
        %716 = vmatprep.mubr.bf16.mxu0 0
        %717 = vmatmul.mubr.bf16.gmra.mrb[0].mxu0 %v544
        %v718 = vpop.f32.mrb[0].mxu0
        %v719 = vadd.f32 %v410, %v718
        %v720 = vpop.f32.mrb[0].mxu0
        %v721 = vpop.f32.mrb[0].mxu0
        %v722 = vadd.f32 %v410, %v721
        %v723 = vpop.f32.mrb[0].mxu0
        %724 = vmatprep.mubr.bf16.mxu0 0
        %725 = vmatmul.mubr.bf16.gmra.mrb[0].mxu0 %v545
        %v726 = vpop.f32.mrb[0].mxu0
        %v727 = vadd.f32 %v410, %v726
        %v728 = vpop.f32.mrb[0].mxu0
        %v729 = vpop.f32.mrb[0].mxu0
        %v730 = vadd.f32 %v410, %v729
        %v731 = vpop.f32.mrb[0].mxu0
        %732 = vmatprep.mubr.bf16.mxu0 0
        %733 = vmatmul.mubr.bf16.gmra.mrb[0].mxu0 %v546
        %v734 = vpop.f32.mrb[0].mxu0
        %v735 = vadd.f32 %v410, %v734
        %v736 = vpop.f32.mrb[0].mxu0
        %v737 = vpop.f32.mrb[0].mxu0
        %v738 = vadd.f32 %v410, %v737
        %v739 = vpop.f32.mrb[0].mxu0
        %740 = vmatprep.mubr.bf16.mxu0 0
        %741 = vmatmul.mubr.bf16.gmra.mrb[0].mxu0 %v547
        %v742 = vpop.f32.mrb[0].mxu0
        %v743 = vadd.f32 %v410, %v742
        %v744 = vpop.f32.mrb[0].mxu0
        %v745 = vpop.f32.mrb[0].mxu0
        %v746 = vadd.f32 %v410, %v745
        %v747 = vpop.f32.mrb[0].mxu0
        %748 = vmatprep.mubr.bf16.mxu0 0
        %749 = vmatmul.mubr.bf16.gmra.mrb[0].mxu0 %v548
        %v750 = vpop.f32.mrb[0].mxu0
        %v751 = vadd.f32 %v410, %v750
        %v752 = vpop.f32.mrb[0].mxu0
        %v753 = vpop.f32.mrb[0].mxu0
        %v754 = vadd.f32 %v410, %v753
        %v755 = vpop.f32.mrb[0].mxu0
        %756 = vmatprep.mubr.bf16.mxu0 0
        %757 = vmatmul.mubr.bf16.gmra.mrb[0].mxu0 %v549
        %v758 = vpop.f32.mrb[0].mxu0
        %v759 = vadd.f32 %v410, %v758
        %v760 = vpop.f32.mrb[0].mxu0
        %v761 = vpop.f32.mrb[0].mxu0
        %v762 = vadd.f32 %v410, %v761
        %v763 = vpop.f32.mrb[0].mxu0
        %764 = vmatprep.mubr.bf16.mxu0 0
        %765 = vmatmul.mubr.bf16.gmra.mrb[0].mxu0 %v550
        %v766 = vpop.f32.mrb[0].mxu0
        %v767 = vadd.f32 %v410, %v766
        %v768 = vpop.f32.mrb[0].mxu0
        %v769 = vpop.f32.mrb[0].mxu0
        %v770 = vadd.f32 %v410, %v769
        %v771 = vpop.f32.mrb[0].mxu0
        %772 = vmatprep.mubr.bf16.mxu0 0
        %773 = vmatmul.mubr.bf16.gmra.mrb[0].mxu0 %v551
        %v774 = vpop.f32.mrb[0].mxu0
        %v775 = vadd.f32 %v410, %v774
        %v776 = vpop.f32.mrb[0].mxu0
        %v777 = vpop.f32.mrb[0].mxu0
        %v778 = vadd.f32 %v410, %v777
        %v779 = vpop.f32.mrb[0].mxu0
        %780 = vmatprep.mubr.bf16.mxu0 0
        %781 = vmatmul.mubr.bf16.gmra.mrb[0].mxu0 %v552
        %v782 = vpop.f32.mrb[0].mxu0
        %v783 = vadd.f32 %v410, %v782
        %v784 = vpop.f32.mrb[0].mxu0
        %v785 = vpop.f32.mrb[0].mxu0
        %v786 = vadd.f32 %v410, %v785
        %v787 = vpop.f32.mrb[0].mxu0
        %788 = vmatprep.mubr.bf16.mxu0 0
        %789 = vmatmul.mubr.bf16.gmra.mrb[0].mxu0 %v553
        %v790 = vpop.f32.mrb[0].mxu0
        %v791 = vadd.f32 %v410, %v790
        %v792 = vpop.f32.mrb[0].mxu0
        %v793 = vpop.f32.mrb[0].mxu0
        %v794 = vadd.f32 %v410, %v793
        %v795 = vpop.f32.mrb[0].mxu0
        %796 = vmatprep.mubr.bf16.mxu0 0
        %797 = vmatmul.mubr.bf16.gmra.mrb[0].mxu0 %v554
        %v798 = vpop.f32.mrb[0].mxu0
        %v799 = vadd.f32 %v410, %v798
        %v800 = vpop.f32.mrb[0].mxu0
        %v801 = vpop.f32.mrb[0].mxu0
        %v802 = vadd.f32 %v410, %v801
        %v803 = vpop.f32.mrb[0].mxu0
        %804 = vmatprep.mubr.bf16.mxu0 0
        %805 = vmatmul.mubr.bf16.gmra.mrb[0].mxu0 %v555
        %v806 = vpop.f32.mrb[0].mxu0
        %v807 = vadd.f32 %v410, %v806
        %v808 = vpop.f32.mrb[0].mxu0
        %v809 = vpop.f32.mrb[0].mxu0
        %v810 = vadd.f32 %v410, %v809
        %v811 = vpop.f32.mrb[0].mxu0
        %812 = vmatprep.mubr.bf16.mxu0 0
        %813 = vmatmul.mubr.bf16.gmra.mrb[0].mxu0 %v556
        %v814 = vpop.f32.mrb[0].mxu0
        %v815 = vadd.f32 %v410, %v814
        %v816 = vpop.f32.mrb[0].mxu0
        %v817 = vpop.f32.mrb[0].mxu0
        %v818 = vadd.f32 %v410, %v817
        %v819 = vpop.f32.mrb[0].mxu0
        %820 = vmatprep.mubr.bf16.mxu0 0
        %821 = vmatmul.mubr.bf16.gmra.mrb[0].mxu0 %v557
        %v822 = vpop.f32.mrb[0].mxu0
        %v823 = vadd.f32 %v410, %v822
        %v824 = vpop.f32.mrb[0].mxu0
        %v825 = vpop.f32.mrb[0].mxu0
        %v826 = vadd.f32 %v410, %v825
        %v827 = vpop.f32.mrb[0].mxu0
        %828 = vmatprep.mubr.bf16.mxu0 0
        %829 = vmatmul.mubr.bf16.gmra.mrb[0].mxu0 %v558
        %v830 = vpop.f32.mrb[0].mxu0
        %v831 = vadd.f32 %v410, %v830
        %v832 = vpop.f32.mrb[0].mxu0
        %v833 = vpop.f32.mrb[0].mxu0
        %v834 = vadd.f32 %v410, %v833
        %v835 = vpop.f32.mrb[0].mxu0
        %836 = vmatprep.mubr.bf16.mxu0 0
        %837 = vmatmul.mubr.bf16.gmra.mrb[0].mxu0 %v559
        %v838 = vpop.f32.mrb[0].mxu0
        %v839 = vadd.f32 %v410, %v838
        %v840 = vpop.f32.mrb[0].mxu0
        %v841 = vpop.f32.mrb[0].mxu0
        %v842 = vadd.f32 %v410, %v841
        %v843 = vpop.f32.mrb[0].mxu0
        %844 = vmatprep.mubr.bf16.mxu0 0
        %845 = vmatmul.mubr.bf16.gmra.mrb[0].mxu0 %v560
        %v846 = vpop.f32.mrb[0].mxu0
        %v847 = vadd.f32 %v410, %v846
        %v848 = vpop.f32.mrb[0].mxu0
        %v849 = vpop.f32.mrb[0].mxu0
        %v850 = vadd.f32 %v410, %v849
        %v851 = vpop.f32.mrb[0].mxu0
        %852 = vmatprep.mubr.bf16.mxu0 0
        %853 = vmatmul.mubr.bf16.gmra.mrb[0].mxu0 %v561
        %v854 = vpop.f32.mrb[0].mxu0
        %v855 = vadd.f32 %v410, %v854
        %v856 = vpop.f32.mrb[0].mxu0
        %v857 = vpop.f32.mrb[0].mxu0
        %v858 = vadd.f32 %v410, %v857
        %v859 = vpop.f32.mrb[0].mxu0
        %860 = vmatprep.mubr.bf16.mxu0 0
        %861 = vmatmul.mubr.bf16.gmra.mrb[0].mxu0 %v562
        %v862 = vpop.f32.mrb[0].mxu0
        %v863 = vadd.f32 %v410, %v862
        %v864 = vpop.f32.mrb[0].mxu0
        %v865 = vpop.f32.mrb[0].mxu0
        %v866 = vadd.f32 %v410, %v865
        %v867 = vpop.f32.mrb[0].mxu0
        %868 = vmatprep.mubr.bf16.mxu0 0
        %869 = vmatmul.mubr.bf16.gmra.mrb[0].mxu0 %v563
        %v870 = vpop.f32.mrb[0].mxu0
        %v871 = vadd.f32 %v410, %v870
        %v872 = vpop.f32.mrb[0].mxu0
        %v873 = vpop.f32.mrb[0].mxu0
        %v874 = vadd.f32 %v410, %v873
        %v875 = vpop.f32.mrb[0].mxu0
        %876 = vmatprep.mubr.bf16.mxu0 0
        %877 = vmatmul.mubr.bf16.gmra.mrb[0].mxu0 %v564
        %v878 = vpop.f32.mrb[0].mxu0
        %v879 = vadd.f32 %v410, %v878
        %v880 = vpop.f32.mrb[0].mxu0
        %v881 = vpop.f32.mrb[0].mxu0
        %v882 = vadd.f32 %v410, %v881
        %v883 = vpop.f32.mrb[0].mxu0
        %884 = vmatprep.mubr.bf16.mxu0 0
        %885 = vmatmul.mubr.bf16.gmra.mrb[0].mxu0 %v565
        %v886 = vpop.f32.mrb[0].mxu0
        %v887 = vadd.f32 %v410, %v886
        %v888 = vpop.f32.mrb[0].mxu0
        %v889 = vpop.f32.mrb[0].mxu0
        %v890 = vadd.f32 %v410, %v889
        %v891 = vpop.f32.mrb[0].mxu0
        %892 = vmatprep.mubr.bf16.mxu0 0
        %893 = vmatmul.mubr.bf16.gmra.mrb[0].mxu0 %v566
        %v894 = vpop.f32.mrb[0].mxu0
        %v895 = vadd.f32 %v410, %v894
        %v896 = vpop.f32.mrb[0].mxu0
        %v897 = vpop.f32.mrb[0].mxu0
        %v898 = vadd.f32 %v410, %v897
        %v899 = vpop.f32.mrb[0].mxu0
        %900 = vmatprep.mubr.bf16.mxu0 0
        %901 = vmatmul.mubr.bf16.gmra.mrb[0].mxu0 %v567
        %v902 = vpop.f32.mrb[0].mxu0
        %v903 = vadd.f32 %v410, %v902
        %v904 = vpop.f32.mrb[0].mxu0
        %v905 = vpop.f32.mrb[0].mxu0
        %v906 = vadd.f32 %v410, %v905
        %v907 = vpop.f32.mrb[0].mxu0
        %908 = vmatprep.mubr.bf16.mxu0 0
        %909 = vmatmul.mubr.bf16.gmra.mrb[0].mxu0 %v568
        %v910 = vpop.f32.mrb[0].mxu0
        %v911 = vadd.f32 %v410, %v910
        %v912 = vpop.f32.mrb[0].mxu0
        %v913 = vpop.f32.mrb[0].mxu0
        %v914 = vadd.f32 %v410, %v913
        %v915 = vpop.f32.mrb[0].mxu0
        %916 = vmatprep.mubr.bf16.mxu0 0
        %917 = vmatmul.mubr.bf16.gmra.mrb[0].mxu0 %v569
        %v918 = vpop.f32.mrb[0].mxu0
        %v919 = vadd.f32 %v410, %v918
        %v920 = vpop.f32.mrb[0].mxu0
        %v921 = vpop.f32.mrb[0].mxu0
        %v922 = vadd.f32 %v410, %v921
        %v923 = vpop.f32.mrb[0].mxu0
        %924 = vmatprep.mubr.bf16.mxu0 0
        %925 = vmatmul.mubr.bf16.gmra.mrb[0].mxu0 %v570
        %v926 = vpop.f32.mrb[0].mxu0
        %v927 = vadd.f32 %v410, %v926
        %v928 = vpop.f32.mrb[0].mxu0
        %v929 = vpop.f32.mrb[0].mxu0
        %v930 = vadd.f32 %v410, %v929
        %v931 = vpop.f32.mrb[0].mxu0
        %932 = vmatprep.mubr.bf16.mxu0 0
        %933 = vmatmul.mubr.bf16.gmra.mrb[0].mxu0 %v571
        %v934 = vpop.f32.mrb[0].mxu0
        %v935 = vadd.f32 %v410, %v934
        %v936 = vpop.f32.mrb[0].mxu0
        %v937 = vpop.f32.mrb[0].mxu0
        %v938 = vadd.f32 %v410, %v937
        %v939 = vpop.f32.mrb[0].mxu0
        %940 = vdwg.mxu0
        %v941 = vmax.f32 %v687, 0.0
        %v942 = vmax.f32 %v690, 0.0
        %v943 = vmax.f32 %v695, 0.0
        %v944 = vmax.f32 %v698, 0.0
        %v945 = vmax.f32 %v703, 0.0
        %v946 = vmax.f32 %v706, 0.0
        %v947 = vmax.f32 %v711, 0.0
        %v948 = vmax.f32 %v714, 0.0
        %v949 = vmax.f32 %v719, 0.0
        %v950 = vmax.f32 %v722, 0.0
        %v951 = vmax.f32 %v727, 0.0
        %v952 = vmax.f32 %v730, 0.0
        %v953 = vmax.f32 %v735, 0.0
        %v954 = vmax.f32 %v738, 0.0
        %v955 = vmax.f32 %v743, 0.0
        %v956 = vmax.f32 %v746, 0.0
        %v957 = vmax.f32 %v751, 0.0
        %v958 = vmax.f32 %v754, 0.0
        %v959 = vmax.f32 %v759, 0.0
        %v960 = vmax.f32 %v762, 0.0
        %v961 = vmax.f32 %v767, 0.0
        %v962 = vmax.f32 %v770, 0.0
        %v963 = vmax.f32 %v775, 0.0
        %v964 = vmax.f32 %v778, 0.0
        %v965 = vmax.f32 %v783, 0.0
        %v966 = vmax.f32 %v786, 0.0
        %v967 = vmax.f32 %v791, 0.0
        %v968 = vmax.f32 %v794, 0.0
        %v969 = vmax.f32 %v799, 0.0
        %v970 = vmax.f32 %v802, 0.0
        %v971 = vmax.f32 %v807, 0.0
        %v972 = vmax.f32 %v810, 0.0
        %v973 = vmax.f32 %v815, 0.0
        %v974 = vmax.f32 %v818, 0.0
        %v975 = vmax.f32 %v823, 0.0
        %v976 = vmax.f32 %v826, 0.0
        %v977 = vmax.f32 %v831, 0.0
        %v978 = vmax.f32 %v834, 0.0
        %v979 = vmax.f32 %v839, 0.0
        %v980 = vmax.f32 %v842, 0.0
        %v981 = vmax.f32 %v847, 0.0
        %v982 = vmax.f32 %v850, 0.0
        %v983 = vmax.f32 %v855, 0.0
        %v984 = vmax.f32 %v858, 0.0
        %v985 = vmax.f32 %v863, 0.0
        %v986 = vmax.f32 %v866, 0.0
        %v987 = vmax.f32 %v871, 0.0
        %v988 = vmax.f32 %v874, 0.0
        %v989 = vmax.f32 %v879, 0.0
        %v990 = vmax.f32 %v882, 0.0
        %v991 = vmax.f32 %v887, 0.0
        %v992 = vmax.f32 %v890, 0.0
        %v993 = vmax.f32 %v895, 0.0
        %v994 = vmax.f32 %v898, 0.0
        %v995 = vmax.f32 %v903, 0.0
        %v996 = vmax.f32 %v906, 0.0
        %v997 = vmax.f32 %v911, 0.0
        %v998 = vmax.f32 %v914, 0.0
        %v999 = vmax.f32 %v919, 0.0
        %v1000 = vmax.f32 %v922, 0.0
        %v1001 = vmax.f32 %v927, 0.0
        %v1002 = vmax.f32 %v930, 0.0
        %v1003 = vmax.f32 %v935, 0.0
        %v1004 = vmax.f32 %v938, 0.0
        %s1005 = sshra.s32 %s28, 1
        %s1006 = sand.u32 %s28, 1
        %s1007 = sshra.s32 %s28, 1
        %s1008 = sand.u32 %s28, 1
        %s1009 = smul.u32 %s1005, 4
        %s1010 = smul.u32 %s1009, 2
        %s1011 = sadd.s32 %s1010, %s1008
        %s1012 = scalar_lea.vmem %s0, %s1011
        %v1013 = vld [vmem:[%s1012] ss:$2 sm:$0xf]
        %s1014 = smul.u32 %s26, 24
        %v1015 = vlaneseq
        %v1016 = vshrl.u32 %v1015, 7
        %v1017 = vadd.s32 %v1016, 8
        %v1018 = vadd.s32 %v1016, 16
        %v1019 = vstv %s1014
        %v1020 = vadd.s32 %v1016, %v1019
        %v1021 = vadd.s32 %v1017, %v1019
        %v1022 = vadd.s32 %v1018, %v1019
        %v1023 = vlaneseq
        %v1024 = vshrl.u32 %v1023, 7
        %v1025 = vsub.s32 0, %v1024
        %v1026 = vrot.slane %v1013, %v1025
        %v1027 = vlaneseq
        %v1028 = vshrl.u32 %v1027, 7
        %v1029 = vsub.s32 1, %v1028
        %v1030 = vrot.slane %v1013, %v1029
        %v1031 = vlaneseq
        %v1032 = vshrl.u32 %v1031, 7
        %v1033 = vsub.s32 2, %v1032
        %v1034 = vrot.slane %v1013, %v1033
        %v1035 = vlaneseq
        %v1036 = vshrl.u32 %v1035, 7
        %v1037 = vsub.s32 3, %v1036
        %v1038 = vrot.slane %v1013, %v1037
        %vm1039 = vcmp.eq.s32.totalorder %v1020, %v1026
        %vm1040 = vcmp.eq.s32.totalorder %v1020, %v1030
        %vm1041 = vcmp.eq.s32.totalorder %v1020, %v1034
        %vm1042 = vcmp.eq.s32.totalorder %v1020, %v1038
        %vm1043 = vcmp.eq.s32.totalorder %v1021, %v1026
        %vm1044 = vcmp.eq.s32.totalorder %v1021, %v1030
        %vm1045 = vcmp.eq.s32.totalorder %v1021, %v1034
        %vm1046 = vcmp.eq.s32.totalorder %v1021, %v1038
        %vm1047 = vcmp.eq.s32.totalorder %v1022, %v1026
        %vm1048 = vcmp.eq.s32.totalorder %v1022, %v1030
        %vm1049 = vcmp.eq.s32.totalorder %v1022, %v1034
        %vm1050 = vcmp.eq.s32.totalorder %v1022, %v1038
        %v1051 = vsel %vm1039, 1, 0
        %v1052 = vsel %vm1040, 1, 0
        %v1053 = vsel %vm1041, 1, 0
        %v1054 = vsel %vm1042, 1, 0
        %v1055 = vsel %vm1043, 1, 0
        %v1056 = vsel %vm1044, 1, 0
        %v1057 = vsel %vm1045, 1, 0
        %v1058 = vsel %vm1046, 1, 0
        %v1059 = vsel %vm1047, 1, 0
        %v1060 = vsel %vm1048, 1, 0
        %v1061 = vsel %vm1049, 1, 0
        %v1062 = vsel %vm1050, 1, 0
        %v1063 = vcvt.s32.f32 %v1051
        %v1064 = vcvt.s32.f32 %v1052
        %v1065 = vcvt.s32.f32 %v1053
        %v1066 = vcvt.s32.f32 %v1054
        %v1067 = vcvt.s32.f32 %v1055
        %v1068 = vcvt.s32.f32 %v1056
        %v1069 = vcvt.s32.f32 %v1057
        %v1070 = vcvt.s32.f32 %v1058
        %v1071 = vcvt.s32.f32 %v1059
        %v1072 = vcvt.s32.f32 %v1060
        %v1073 = vcvt.s32.f32 %v1061
        %v1074 = vcvt.s32.f32 %v1062
        %v1075 = vpack.c.bf16 %v1067, %v1063
        %v1076 = vpack.c.bf16 %v1068, %v1064
        %v1077 = vpack.c.bf16 %v1069, %v1065
        %v1078 = vpack.c.bf16 %v1070, %v1066
        %v1079 = vpack.c.bf16 %v1071, %v1071
        %v1080 = vpack.c.bf16 %v1072, %v1072
        %v1081 = vpack.c.bf16 %v1073, %v1073
        %v1082 = vpack.c.bf16 %v1074, %v1074
        %v1083 = vld [vmem:[#allocation2] sm:$0xff]
        %v1084 = vld [vmem:[#allocation2 + $0x8] sm:$0xff]
        %v1085 = vld [vmem:[#allocation2 + $0x10] sm:$0xff]
        %v1086 = vpack.c.bf16 %v942, %v941
        %v1087 = vpack.c.bf16 %v944, %v943
        %v1088 = vpack.c.bf16 %v946, %v945
        %v1089 = vpack.c.bf16 %v948, %v947
        %v1090 = vpack.c.bf16 %v950, %v949
        %v1091 = vpack.c.bf16 %v952, %v951
        %v1092 = vpack.c.bf16 %v954, %v953
        %v1093 = vpack.c.bf16 %v956, %v955
        %v1094 = vpack.c.bf16 %v958, %v957
        %v1095 = vpack.c.bf16 %v960, %v959
        %v1096 = vpack.c.bf16 %v962, %v961
        %v1097 = vpack.c.bf16 %v964, %v963
        %v1098 = vpack.c.bf16 %v966, %v965
        %v1099 = vpack.c.bf16 %v968, %v967
        %v1100 = vpack.c.bf16 %v970, %v969
        %v1101 = vpack.c.bf16 %v972, %v971
        %v1102 = vpack.c.bf16 %v974, %v973
        %v1103 = vpack.c.bf16 %v976, %v975
        %v1104 = vpack.c.bf16 %v978, %v977
        %v1105 = vpack.c.bf16 %v980, %v979
        %v1106 = vpack.c.bf16 %v982, %v981
        %v1107 = vpack.c.bf16 %v984, %v983
        %v1108 = vpack.c.bf16 %v986, %v985
        %v1109 = vpack.c.bf16 %v988, %v987
        %v1110 = vpack.c.bf16 %v990, %v989
        %v1111 = vpack.c.bf16 %v992, %v991
        %v1112 = vpack.c.bf16 %v994, %v993
        %v1113 = vpack.c.bf16 %v996, %v995
        %v1114 = vpack.c.bf16 %v998, %v997
        %v1115 = vpack.c.bf16 %v1000, %v999
        %v1116 = vpack.c.bf16 %v1002, %v1001
        %v1117 = vpack.c.bf16 %v1004, %v1003
        %1118 = vmatprep.subr.bf16.mxu0 0
        %1119 = vmatpush1.bf16.msra.mxu0 %v1086
        %1120 = vmatprep.subr.bf16.mxu0 0
        %1121 = vmatpush1.bf16.msra.mxu0 %v1087
        %1122 = vmatprep.subr.bf16.mxu0 0
        %1123 = vmatpush1.bf16.msra.mxu0 %v1088
        %1124 = vmatprep.subr.bf16.mxu0 0
        %1125 = vmatpush1.bf16.msra.mxu0 %v1089
        %1126 = vmatprep.subr.bf16.mxu0 0
        %1127 = vmatpush1.bf16.msra.mxu0 %v1090
        %1128 = vmatprep.subr.bf16.mxu0 0
        %1129 = vmatpush1.bf16.msra.mxu0 %v1091
        %1130 = vmatprep.subr.bf16.mxu0 0
        %1131 = vmatpush1.bf16.msra.mxu0 %v1092
        %1132 = vmatprep.subr.bf16.mxu0 0
        %1133 = vmatpush1.bf16.msra.mxu0 %v1093
        %1134 = vmatprep.subr.bf16.mxu0 0
        %1135 = vmatpush1.bf16.msra.mxu0 %v1094
        %1136 = vmatprep.subr.bf16.mxu0 0
        %1137 = vmatpush1.bf16.msra.mxu0 %v1095
        %1138 = vmatprep.subr.bf16.mxu0 0
        %1139 = vmatpush1.bf16.msra.mxu0 %v1096
        %1140 = vmatprep.subr.bf16.mxu0 0
        %1141 = vmatpush1.bf16.msra.mxu0 %v1097
        %1142 = vmatprep.subr.bf16.mxu0 0
        %1143 = vmatpush1.bf16.msra.mxu0 %v1098
        %1144 = vmatprep.subr.bf16.mxu0 0
        %1145 = vmatpush1.bf16.msra.mxu0 %v1099
        %1146 = vmatprep.subr.bf16.mxu0 0
        %1147 = vmatpush1.bf16.msra.mxu0 %v1100
        %1148 = vmatprep.subr.bf16.mxu0 0
        %1149 = vmatpush1.bf16.msra.mxu0 %v1101
        %1150 = vmatprep.mubr.bf16.mxu0 %v1076
        %1151 = vmatmul.mubr.bf16.gmra.mrb[0].mxu0 %v1075
        %v1152 = vpop.f32.mrb[0].mxu0
        %v1153 = vadd.f32 0.0, %v1152
        %v1154 = vpop.f32.mrb[0].mxu0
        %v1155 = vpop.f32.mrb[0].mxu0
        %v1156 = vadd.f32 0.0, %v1155
        %v1157 = vpop.f32.mrb[0].mxu0
        %1158 = vmatprep.mubr.bf16.mxu0 %v1080
        %1159 = vmatmul.mubr.bf16.gmra.mrb[0].mxu0 %v1079
        %v1160 = vpop.f32.mrb[0].mxu0
        %v1161 = vadd.f32 0.0, %v1160
        %v1162 = vpop.f32.mrb[0].mxu0
        %v1163 = vpop.f32.mrb[0].mxu0
        %v1164 = vpop.f32.mrb[0].mxu0
        %1165 = vdwg.mxu0
        %1166 = vmatprep.subr.bf16.mxu0 0
        %1167 = vmatpush1.bf16.msra.mxu0 %v1102
        %1168 = vmatprep.subr.bf16.mxu0 0
        %1169 = vmatpush1.bf16.msra.mxu0 %v1103
        %1170 = vmatprep.subr.bf16.mxu0 0
        %1171 = vmatpush1.bf16.msra.mxu0 %v1104
        %1172 = vmatprep.subr.bf16.mxu0 0
        %1173 = vmatpush1.bf16.msra.mxu0 %v1105
        %1174 = vmatprep.subr.bf16.mxu0 0
        %1175 = vmatpush1.bf16.msra.mxu0 %v1106
        %1176 = vmatprep.subr.bf16.mxu0 0
        %1177 = vmatpush1.bf16.msra.mxu0 %v1107
        %1178 = vmatprep.subr.bf16.mxu0 0
        %1179 = vmatpush1.bf16.msra.mxu0 %v1108
        %1180 = vmatprep.subr.bf16.mxu0 0
        %1181 = vmatpush1.bf16.msra.mxu0 %v1109
        %1182 = vmatprep.subr.bf16.mxu0 0
        %1183 = vmatpush1.bf16.msra.mxu0 %v1110
        %1184 = vmatprep.subr.bf16.mxu0 0
        %1185 = vmatpush1.bf16.msra.mxu0 %v1111
        %1186 = vmatprep.subr.bf16.mxu0 0
        %1187 = vmatpush1.bf16.msra.mxu0 %v1112
        %1188 = vmatprep.subr.bf16.mxu0 0
        %1189 = vmatpush1.bf16.msra.mxu0 %v1113
        %1190 = vmatprep.subr.bf16.mxu0 0
        %1191 = vmatpush1.bf16.msra.mxu0 %v1114
        %1192 = vmatprep.subr.bf16.mxu0 0
        %1193 = vmatpush1.bf16.msra.mxu0 %v1115
        %1194 = vmatprep.subr.bf16.mxu0 0
        %1195 = vmatpush1.bf16.msra.mxu0 %v1116
        %1196 = vmatprep.subr.bf16.mxu0 0
        %1197 = vmatpush1.bf16.msra.mxu0 %v1117
        %1198 = vmatprep.mubr.bf16.mxu0 %v1078
        %1199 = vmatmul.mubr.bf16.gmra.mrb[0].mxu0 %v1077
        %v1200 = vpop.f32.mrb[0].mxu0
        %v1201 = vadd.f32 %v1153, %v1200
        %v1202 = vpop.f32.mrb[0].mxu0
        %v1203 = vpop.f32.mrb[0].mxu0
        %v1204 = vadd.f32 %v1156, %v1203
        %v1205 = vpop.f32.mrb[0].mxu0
        %1206 = vmatprep.mubr.bf16.mxu0 %v1082
        %1207 = vmatmul.mubr.bf16.gmra.mrb[0].mxu0 %v1081
        %v1208 = vpop.f32.mrb[0].mxu0
        %v1209 = vadd.f32 %v1161, %v1208
        %v1210 = vpop.f32.mrb[0].mxu0
        %v1211 = vpop.f32.mrb[0].mxu0
        %v1212 = vpop.f32.mrb[0].mxu0
        %1213 = vdwg.mxu0
        %v1214 = vadd.f32 %v1083, %v1201
        %v1215 = vadd.f32 %v1084, %v1204
        %v1216 = vadd.f32 %v1085, %v1209
        %1217 = vst [vmem:[#allocation2] sm:$0xff] %v1214
        %1218 = vst [vmem:[#allocation2 + $0x8] sm:$0xff] %v1215
        %1219 = vst [vmem:[#allocation2 + $0x10] sm:$0xff] %v1216
        %p1220 = scmp.eq.s32.totalorder %s28, 1
        // Predicated region
        $region53: #{tpu_custom_call.1} parent=39 // pred_check
          %p1221 = pneg %p1220
        $region54: #{tpu_custom_call.1} parent=39 // pred_check_branch
          %1223 = sbr.rel (%p1221) target = $region56
        $region55: #{tpu_custom_call.1} parent=39 // pred_region
          %v1224 = vld [vmem:[#allocation2] sm:$0xff]
          %v1225 = vld [vmem:[#allocation2 + $0x8] sm:$0xff]
          %v1226 = vld [vmem:[#allocation2 + $0x10] sm:$0xff]
          %v1227 = vld [vmem:[%s314] sm:$0xff]
          %v1228 = vld [vmem:[%s314 + $0x8] sm:$0xff]
          %v1229 = vld [vmem:[%s314 + $0x10] sm:$0xff]
          %1231 = vset.pattern.permute.xlu0 0
          %1232 = vperm.xlu0 %1231, %v1227
          %v1233 = vpop.permute.xlu0 %1232
          %1236 = vset.pattern.permute.xlu0 0
          %1237 = vperm.xlu0 %1236, %v1228
          %v1238 = vpop.permute.xlu0 %1237
          %1241 = vset.pattern.permute.xlu0 0
          %1242 = vperm.xlu0 %1241, %v1229
          %v1243 = vpop.permute.xlu0 %1242
          %v1245 = vmul.f32 %v1224, %v1233
          %v1246 = vmul.f32 %v1225, %v1238
          %v1247 = vmul.f32 %v1226, %v1243
          %1248 = vst [vmem:[#allocation8] sm:$0xff] %v1245
          %1249 = vst [vmem:[#allocation8 + $0x8] sm:$0xff] %v1246
          %1250 = vst [vmem:[#allocation8 + $0x10] sm:$0xff] %v1247
        $region56: #{tpu_custom_call.1} parent=39 // pred_fallthru
          _
        // Predicated region
        $region57: #{tpu_custom_call.1} parent=39 // pred_check
          %p1251 = pneg %p185
        $region58: #{tpu_custom_call.1} parent=39 // pred_check_branch
          %1253 = sbr.rel (%p1251) target = $region60
        $region59: #{tpu_custom_call.1} parent=39 // pred_region
          %s1254 = smul.u32 3, %s26
          %s1256 = ssub.s32 384, 384
          %1257 = vsyncadd [#allocation5], %s1256
          %s1258 = sadd.s32 %s27, %s1254
          %s1259 = smul.addr %s1258, 128
          %s1260 = scalar_lea.hbm %s5, %s1259
          %s1261 = sshll.u32 [#allocation8], 4
          %s1262 = int_to_ptr.vmem [resolvable:$true] %s1261
          %1267 = dma.vmem_to_hbm [thread:$0]  %s1262, 384, %s1260, [#allocation5], 128, 128, 8
        $region60: #{tpu_custom_call.1} parent=39 // pred_fallthru
          _
        // Predicated region
        $region61: #{tpu_custom_call.1} parent=39 // pred_check
          %p1268 = pneg %p185
        $region62: #{tpu_custom_call.1} parent=39 // pred_check_branch
          %1270 = sbr.rel (%p1268) target = $region64
        $region63: #{tpu_custom_call.1} parent=39 // pred_region
          %1271 = dma.done [#allocation5], 384
        $region64: #{tpu_custom_call.1} parent=39 // pred_fallthru
          _
      $region40: #{tpu_custom_call.1} parent=5 // pred_fallthru
        _
      %p1272 = scmp.le.s32.totalorder 2, %s16
      // Predicated region
      $region65: #{tpu_custom_call.1} parent=5 // pred_check
        %p1273 = pneg %p1272
      $region66: #{tpu_custom_call.1} parent=5 // pred_check_branch
        %1275 = sbr.rel (%p1273) target = $region68
      $region67: #{tpu_custom_call.1} parent=5 // pred_region
        %s1276 = ssub.s32 %s16, 2
      $region68: #{tpu_custom_call.1} parent=5 // pred_fallthru
        _
    $region6: #{tpu_custom_call.1} parent=1 // loop_footer
      %s20 = sadd.s32 1, %s16
    $region7: #{tpu_custom_call.1} parent=1 // loop_footer_branch
      %15 = sbr.rel target = $region3
    $region8: #{tpu_custom_call.1} parent=1 // loop_exit
      _
    %1277 = vsyncpa [#allocation4], 1
    %s1278 = scalar_lea.sflag [#allocation4], 1
    %1279 = vsyncpa %s1278, 1
    %1280 = vsyncpa [#allocation7], 1
    %1281 = vsyncpa [#allocation5], 1
    %s1282 = scalar_lea.sflag [#allocation5], 1
    %1283 = vsyncpa %s1282, 1

</llo_original>
